<compile_context>
chip_gen: v7x
topology: tpu7x:2x2x1
jax: 0.10.0
libtpu: 0.0.40
codegen_flags: <defaults>
</compile_context>

<pallas_src>
import jax
import jax.numpy as jnp
from jax.experimental import pallas as pl
from jax.experimental.pallas import tpu as pltpu

_NUM_SLOTS = 8  # outstanding row-gather DMAs kept in flight (power of two)
assert _NUM_SLOTS & (_NUM_SLOTS - 1) == 0


def _pte_gather_kernel(idx_ref, w_hbm, p_hbm, out_ref, buf, sems):
    """Gather T embedding rows (one HBM row per token) into a (T, H) block."""
    T = out_ref.shape[0]
    base = pl.program_id(0) * T

    def issue(t):
        slot = t & (_NUM_SLOTS - 1)
        enc = idx_ref[base + t]
        dst = buf.at[pl.ds(t, 1), :]

        @pl.when(enc < 0)
        def _():  # prompt-tuning table row (-enc - 1)
            pltpu.make_async_copy(
                p_hbm.at[pl.ds(-enc - 1, 1), :], dst, sems.at[slot]).start()

        @pl.when(enc >= 0)
        def _():  # vocab table row enc
            pltpu.make_async_copy(
                w_hbm.at[pl.ds(enc, 1), :], dst, sems.at[slot]).start()

    def wait(t):
        slot = t & (_NUM_SLOTS - 1)
        # Wait descriptor only needs the (1, H)-row byte count; both tables
        # copy identical byte counts, so the src used here is irrelevant.
        pltpu.make_async_copy(
            w_hbm.at[pl.ds(0, 1), :], buf.at[pl.ds(t, 1), :], sems.at[slot]).wait()

    prime = min(_NUM_SLOTS, T)

    # Prime a wave of outstanding row copies.
    @pl.loop(0, prime)
    def _(t):
        issue(t)

    # Steady state: retire row t, immediately reuse its slot for row t + prime.
    @pl.loop(0, T)
    def _(t):
        wait(t)

        @pl.when(t + prime < T)
        def _():
            issue(t + prime)

    out_ref[...] = buf[...]


def _round_up(x, m):
    return ((x + m - 1) // m) * m


def prompt_tuning_embedding(tokens, prompt_embedding_table, tasks,
                            task_vocab_size, weight, *, vocab_size,
                            tokens_per_block=256):
    """Forward pass of PromptTuningEmbedding (tp_size == 1)."""
    B, S = tokens.shape
    V, H = weight.shape
    P, Hp = prompt_embedding_table.shape
    assert H == Hp, "hidden dims of vocab table and prompt table must match"
    prompt_embedding_table = prompt_embedding_table.astype(weight.dtype)

    N = B * S
    itemsize = jnp.dtype(weight.dtype).itemsize
    sub = max(8, 32 // itemsize)            # sublane-dense row multiple for dtype
    T = max(sub, min(_round_up(tokens_per_block, sub), _round_up(N, sub)))
    N_pad = _round_up(N, T)
    num_chunks = N_pad // T

    tok = tokens.reshape(N).astype(jnp.int32)
    tsk = tasks.reshape(N).astype(jnp.int32)
    tvs = task_vocab_size.astype(jnp.int32)[0]          # scalar (runtime value)

    # --- index / mask math hoisted out of the kernel (XLA fuses this) -------
    # prompt_tokens_mask = tokens > vocab_size - 1
    prompt_mask = tok > (vocab_size - 1)
    # normal_tokens = where(mask, vocab_size - 1, tokens)
    # (clamped defensively so malformed ids can never drive an OOB HBM row DMA;
    #  this deviates from TRT-LLM only for already-invalid inputs)
    normal_row = jnp.clip(jnp.where(prompt_mask, vocab_size - 1, tok), 0, V - 1)
    # prompt_tokens = where(mask, tokens - vocab_size, 0) + tasks * task_vocab_size
    prompt_row = jnp.clip(tok - vocab_size + tsk * tvs, 0, P - 1)
    # Single sign-encoded index per token: >=0 -> vocab row, <0 -> prompt row.
    enc = jnp.where(prompt_mask, -(prompt_row + 1), normal_row).astype(jnp.int32)
    if N_pad != N:
        enc = jnp.pad(enc, (0, N_pad - N))   # padded tokens gather vocab row 0

    out = pl.pallas_call(
        _pte_gather_kernel,
        out_shape=jax.ShapeDtypeStruct((N_pad, H), weight.dtype),
        grid_spec=pltpu.PrefetchScalarGridSpec(
            num_scalar_prefetch=1,           # enc -> SMEM
            grid=(num_chunks,),
            in_specs=[
                pl.BlockSpec(memory_space=pl.ANY),   # vocab table stays in HBM
                pl.BlockSpec(memory_space=pl.ANY),   # prompt table stays in HBM
            ],
            out_specs=pl.BlockSpec((T, H), lambda c, idx: (c, 0)),
            scratch_shapes=[
                pltpu.VMEM((T, H), weight.dtype),      # gather staging buffer
                pltpu.SemaphoreType.DMA((_NUM_SLOTS,)),
            ],
        ),
        compiler_params=pltpu.CompilerParams(
            dimension_semantics=("parallel",)),        # megacore-shard chunks (v7x)
        cost_estimate=pl.CostEstimate(
            flops=0, transcendentals=0,
            bytes_accessed=2 * N_pad * H * itemsize + 4 * N_pad),
    )(enc, weight, prompt_embedding_table)

    return out[:N].reshape(B, S, H)


def _reference(tokens, prompt_embedding_table, tasks, task_vocab_size, weight,
               *, vocab_size):
    mask = tokens > vocab_size - 1
    normal_tok = jnp.where(mask, vocab_size - 1, tokens)
    normal_emb = weight[normal_tok]
    prompt_tok = jnp.where(mask, tokens - vocab_size, 0) + tasks * task_vocab_size[0]
    prompt_emb = prompt_embedding_table[prompt_tok]
    return jnp.where(mask[..., None], prompt_emb, normal_emb)


if __name__ == "__main__":
    # Small deterministic configuration.
    batch, seq = 2, 8
    vocab_size = 32          # num_embeddings == vocab_size (tp_size == 1)
    hidden = 128
    num_tasks = 2
    tokens_per_task = 8      # task_vocab_size
    prompt_rows = num_tasks * tokens_per_task

    key = jax.random.PRNGKey(0)
    k_w, k_p, k_tok, k_task = jax.random.split(key, 4)

    weight = jax.random.normal(k_w, (vocab_size, hidden), dtype=jnp.float32)
    prompt_table = jax.random.normal(k_p, (prompt_rows, hidden), dtype=jnp.float32)

    # Tokens: mix of normal ids [0, vocab_size) and prompt ids
    # [vocab_size, vocab_size + tokens_per_task).
    tokens = jax.random.randint(k_tok, (batch, seq), 0,
                                vocab_size + tokens_per_task, dtype=jnp.int32)
    tasks = jax.random.randint(k_task, (batch, seq), 0, num_tasks, dtype=jnp.int32)
    task_vocab_size = jnp.array([tokens_per_task], dtype=jnp.int32)

    ref = _reference(tokens, prompt_table, tasks, task_vocab_size, weight,
                     vocab_size=vocab_size)

    # Default chunk size (single grid step at this tiny N).
    out = prompt_tuning_embedding(tokens, prompt_table, tasks, task_vocab_size,
                                  weight, vocab_size=vocab_size)
    out = jax.block_until_ready(out)
    assert out.shape == (batch, seq, hidden)
    assert jnp.array_equal(out, ref), "mismatch vs reference (single chunk)"

    # Small chunk size to exercise the multi-chunk grid / padding path.
    out2 = prompt_tuning_embedding(tokens, prompt_table, tasks, task_vocab_size,
                                   weight, vocab_size=vocab_size,
                                   tokens_per_block=8)
    out2 = jax.block_until_ready(out2)
    assert jnp.array_equal(out2, ref), "mismatch vs reference (multi chunk)"

    print("KERNEL_OK")
</pallas_src>

<mosaic_0001>
module attributes {stable_mosaic.version = 11 : i64} {
  func.func @_pte_gather_kernel(%arg0: i32, %arg1: memref<16xi32, #tpu.memory_space<smem>>, %arg2: memref<32x128xf32, #tpu.memory_space<any>>, %arg3: memref<16x128xf32, #tpu.memory_space<any>>, %arg4: memref<16x128xf32, #tpu.memory_space<vmem>>, %arg5: memref<16x128xf32, #tpu.memory_space<vmem>>, %arg6: memref<8x!tpu.dma_semaphore, #tpu.memory_space<semaphore_mem>>) attributes {dimension_semantics = [#tpu.dimension_semantics<parallel>], iteration_bounds = array<i64: 1>, scalar_prefetch = 1 : i64, scratch_operands = 2 : i64, tpu.core_type = #tpu.core_type<tc>, window_params = [{}, {}, {transform_indices = @transform_2, window_bounds = array<i64: 16, 128>}]} {
    %c16_i32 = arith.constant 16 : i32
    %0 = arith.muli %arg0, %c16_i32 : i32
    %c0_i32 = arith.constant 0 : i32
    %c8_i32 = arith.constant 8 : i32
    %1 = arith.addi %c0_i32, %c8_i32 : i32
    %c1_i32 = arith.constant 1 : i32
    scf.for %arg7 = %c0_i32 to %1 step %c1_i32  : i32 {
      %c1_i32_8 = arith.constant 1 : i32
      %5 = arith.muli %arg7, %c1_i32_8 : i32
      %c0_i32_9 = arith.constant 0 : i32
      %6 = arith.addi %c0_i32_9, %5 : i32
      %c7_i32 = arith.constant 7 : i32
      %7 = arith.andi %6, %c7_i32 : i32
      %8 = arith.addi %0, %6 : i32
      %9 = arith.index_cast %8 : i32 to index
      %10 = memref.load %arg1[%9] : memref<16xi32, #tpu.memory_space<smem>>
      %c0_i32_10 = arith.constant 0 : i32
      %11 = arith.cmpi slt, %10, %c0_i32_10 : i32
      %12 = arith.extui %11 : i1 to i32
      %c0_i32_11 = arith.constant 0 : i32
      %13 = arith.cmpi ne, %12, %c0_i32_11 : i32
      scf.if %13 {
        %c0_i32_14 = arith.constant 0 : i32
        %17 = arith.subi %c0_i32_14, %10 : i32
        %c1_i32_15 = arith.constant 1 : i32
        %18 = arith.subi %17, %c1_i32_15 : i32
        %c0_i32_16 = arith.constant 0 : i32
        %19 = tpu.memref_slice %arg3[%18, %c0_i32_16] : memref<16x128xf32, #tpu.memory_space<any>> -> memref<1x128xf32, #tpu.memory_space<any>>
        %c0_i32_17 = arith.constant 0 : i32
        %20 = tpu.memref_slice %arg5[%6, %c0_i32_17] : memref<16x128xf32, #tpu.memory_space<vmem>> -> memref<1x128xf32, #tpu.memory_space<vmem>>
        %21 = tpu.memref_slice %arg6[%7] : memref<8x!tpu.dma_semaphore, #tpu.memory_space<semaphore_mem>> -> memref<1x!tpu.dma_semaphore, #tpu.memory_space<semaphore_mem>>
        %22 = tpu.memref_squeeze %21 : memref<1x!tpu.dma_semaphore, #tpu.memory_space<semaphore_mem>> -> memref<!tpu.dma_semaphore, #tpu.memory_space<semaphore_mem>>
        tpu.enqueue_dma source(%19 : memref<1x128xf32, #tpu.memory_space<any>>) target(%20 : memref<1x128xf32, #tpu.memory_space<vmem>>) target_semaphore(%22 : memref<!tpu.dma_semaphore, #tpu.memory_space<semaphore_mem>>)
      } else {
      }
      %c0_i32_12 = arith.constant 0 : i32
      %14 = arith.cmpi sge, %10, %c0_i32_12 : i32
      %15 = arith.extui %14 : i1 to i32
      %c0_i32_13 = arith.constant 0 : i32
      %16 = arith.cmpi ne, %15, %c0_i32_13 : i32
      scf.if %16 {
        %c0_i32_14 = arith.constant 0 : i32
        %17 = tpu.memref_slice %arg2[%10, %c0_i32_14] : memref<32x128xf32, #tpu.memory_space<any>> -> memref<1x128xf32, #tpu.memory_space<any>>
        %c0_i32_15 = arith.constant 0 : i32
        %18 = tpu.memref_slice %arg5[%6, %c0_i32_15] : memref<16x128xf32, #tpu.memory_space<vmem>> -> memref<1x128xf32, #tpu.memory_space<vmem>>
        %19 = tpu.memref_slice %arg6[%7] : memref<8x!tpu.dma_semaphore, #tpu.memory_space<semaphore_mem>> -> memref<1x!tpu.dma_semaphore, #tpu.memory_space<semaphore_mem>>
        %20 = tpu.memref_squeeze %19 : memref<1x!tpu.dma_semaphore, #tpu.memory_space<semaphore_mem>> -> memref<!tpu.dma_semaphore, #tpu.memory_space<semaphore_mem>>
        tpu.enqueue_dma source(%17 : memref<1x128xf32, #tpu.memory_space<any>>) target(%18 : memref<1x128xf32, #tpu.memory_space<vmem>>) target_semaphore(%20 : memref<!tpu.dma_semaphore, #tpu.memory_space<semaphore_mem>>)
      } else {
      }
    }
    %c8_i32_0 = arith.constant 8 : i32
    %c0_i32_1 = arith.constant 0 : i32
    %c16_i32_2 = arith.constant 16 : i32
    %2 = arith.addi %c0_i32_1, %c16_i32_2 : i32
    %c1_i32_3 = arith.constant 1 : i32
    scf.for %arg7 = %c0_i32_1 to %2 step %c1_i32_3  : i32 {
      %c1_i32_8 = arith.constant 1 : i32
      %5 = arith.muli %arg7, %c1_i32_8 : i32
      %c0_i32_9 = arith.constant 0 : i32
      %6 = arith.addi %c0_i32_9, %5 : i32
      %c7_i32 = arith.constant 7 : i32
      %7 = arith.andi %6, %c7_i32 : i32
      %c0_i32_10 = arith.constant 0 : i32
      %c0_i32_11 = arith.constant 0 : i32
      %8 = tpu.memref_slice %arg2[%c0_i32_10, %c0_i32_11] : memref<32x128xf32, #tpu.memory_space<any>> -> memref<1x128xf32, #tpu.memory_space<any>>
      %c0_i32_12 = arith.constant 0 : i32
      %9 = tpu.memref_slice %arg5[%6, %c0_i32_12] : memref<16x128xf32, #tpu.memory_space<vmem>> -> memref<1x128xf32, #tpu.memory_space<vmem>>
      %10 = tpu.memref_slice %arg6[%7] : memref<8x!tpu.dma_semaphore, #tpu.memory_space<semaphore_mem>> -> memref<1x!tpu.dma_semaphore, #tpu.memory_space<semaphore_mem>>
      %11 = tpu.memref_squeeze %10 : memref<1x!tpu.dma_semaphore, #tpu.memory_space<semaphore_mem>> -> memref<!tpu.dma_semaphore, #tpu.memory_space<semaphore_mem>>
      tpu.wait_dma2 semaphore(%11 : memref<!tpu.dma_semaphore, #tpu.memory_space<semaphore_mem>>) src(%8 : memref<1x128xf32, #tpu.memory_space<any>>) dst(%9 : memref<1x128xf32, #tpu.memory_space<vmem>>)
      %c8_i32_13 = arith.constant 8 : i32
      %12 = arith.addi %6, %c8_i32_13 : i32
      %c16_i32_14 = arith.constant 16 : i32
      %13 = arith.cmpi slt, %12, %c16_i32_14 : i32
      %14 = arith.extui %13 : i1 to i32
      %c0_i32_15 = arith.constant 0 : i32
      %15 = arith.cmpi ne, %14, %c0_i32_15 : i32
      scf.if %15 {
        %c8_i32_16 = arith.constant 8 : i32
        %16 = arith.addi %6, %c8_i32_16 : i32
        %c7_i32_17 = arith.constant 7 : i32
        %17 = arith.andi %16, %c7_i32_17 : i32
        %18 = arith.addi %0, %16 : i32
        %19 = arith.index_cast %18 : i32 to index
        %20 = memref.load %arg1[%19] : memref<16xi32, #tpu.memory_space<smem>>
        %c0_i32_18 = arith.constant 0 : i32
        %21 = arith.cmpi slt, %20, %c0_i32_18 : i32
        %22 = arith.extui %21 : i1 to i32
        %c0_i32_19 = arith.constant 0 : i32
        %23 = arith.cmpi ne, %22, %c0_i32_19 : i32
        scf.if %23 {
          %c0_i32_22 = arith.constant 0 : i32
          %27 = arith.subi %c0_i32_22, %20 : i32
          %c1_i32_23 = arith.constant 1 : i32
          %28 = arith.subi %27, %c1_i32_23 : i32
          %c0_i32_24 = arith.constant 0 : i32
          %29 = tpu.memref_slice %arg3[%28, %c0_i32_24] : memref<16x128xf32, #tpu.memory_space<any>> -> memref<1x128xf32, #tpu.memory_space<any>>
          %c0_i32_25 = arith.constant 0 : i32
          %30 = tpu.memref_slice %arg5[%16, %c0_i32_25] : memref<16x128xf32, #tpu.memory_space<vmem>> -> memref<1x128xf32, #tpu.memory_space<vmem>>
          %31 = tpu.memref_slice %arg6[%17] : memref<8x!tpu.dma_semaphore, #tpu.memory_space<semaphore_mem>> -> memref<1x!tpu.dma_semaphore, #tpu.memory_space<semaphore_mem>>
          %32 = tpu.memref_squeeze %31 : memref<1x!tpu.dma_semaphore, #tpu.memory_space<semaphore_mem>> -> memref<!tpu.dma_semaphore, #tpu.memory_space<semaphore_mem>>
          tpu.enqueue_dma source(%29 : memref<1x128xf32, #tpu.memory_space<any>>) target(%30 : memref<1x128xf32, #tpu.memory_space<vmem>>) target_semaphore(%32 : memref<!tpu.dma_semaphore, #tpu.memory_space<semaphore_mem>>)
        } else {
        }
        %c0_i32_20 = arith.constant 0 : i32
        %24 = arith.cmpi sge, %20, %c0_i32_20 : i32
        %25 = arith.extui %24 : i1 to i32
        %c0_i32_21 = arith.constant 0 : i32
        %26 = arith.cmpi ne, %25, %c0_i32_21 : i32
        scf.if %26 {
          %c0_i32_22 = arith.constant 0 : i32
          %27 = tpu.memref_slice %arg2[%20, %c0_i32_22] : memref<32x128xf32, #tpu.memory_space<any>> -> memref<1x128xf32, #tpu.memory_space<any>>
          %c0_i32_23 = arith.constant 0 : i32
          %28 = tpu.memref_slice %arg5[%16, %c0_i32_23] : memref<16x128xf32, #tpu.memory_space<vmem>> -> memref<1x128xf32, #tpu.memory_space<vmem>>
          %29 = tpu.memref_slice %arg6[%17] : memref<8x!tpu.dma_semaphore, #tpu.memory_space<semaphore_mem>> -> memref<1x!tpu.dma_semaphore, #tpu.memory_space<semaphore_mem>>
          %30 = tpu.memref_squeeze %29 : memref<1x!tpu.dma_semaphore, #tpu.memory_space<semaphore_mem>> -> memref<!tpu.dma_semaphore, #tpu.memory_space<semaphore_mem>>
          tpu.enqueue_dma source(%27 : memref<1x128xf32, #tpu.memory_space<any>>) target(%28 : memref<1x128xf32, #tpu.memory_space<vmem>>) target_semaphore(%30 : memref<!tpu.dma_semaphore, #tpu.memory_space<semaphore_mem>>)
        } else {
        }
      } else {
      }
    }
    %c16_i32_4 = arith.constant 16 : i32
    %c0 = arith.constant 0 : index
    %c0_5 = arith.constant 0 : index
    %3 = vector.load %arg5[%c0, %c0_5] : memref<16x128xf32, #tpu.memory_space<vmem>>, vector<16x128xf32>
    %c0_6 = arith.constant 0 : index
    %c0_7 = arith.constant 0 : index
    %4 = vector.load %arg4[%c0_6, %c0_7] : memref<16x128xf32, #tpu.memory_space<vmem>>, vector<16x128xf32>
    tpu.vector_store %arg4[%c0_6, %c0_7], %3 {strides = array<i32>} : memref<16x128xf32, #tpu.memory_space<vmem>>, vector<16x128xf32>,
    return
  }
  func.func @transform_2(%arg0: i32, %arg1: memref<16xi32, #tpu.memory_space<smem>>) -> (i32, i32) {
    %c0_i32 = arith.constant 0 : i32
    %c0_i32_0 = arith.constant 0 : i32
    return %arg0, %c0_i32 : i32, i32
  }
}

</mosaic_0001>

<llo_original>
// kernel: tpu_custom_call.1
$region0: #{tpu_custom_call.1}
  #allocation0 [shape = 'u32[]', space=smem, size = 0x4, offset = 0x4, fixed_abs, tag = 'smem constant byte address 0x4 - core index']
  #allocation1 [shape = 'u32[144,128]{1,0:T(1,128)}', space=vmem, size = 0x12000, scoped, tag = 'internal scratch']
  #allocation2 [shape = 'f32[16,128]{1,0:T(8,128)}', space=vmem, size = 0x2000, scoped, tag = 'scratch operand']
  #allocation3 [shape = 's32[8]{0}', space=sflag, size = 0x20, scoped, tag = 'scratch operand']
  #allocation4 [shape = 's32[1]{0}', space=sflag, size = 0x4, scoped, tag = 'scoped memory for tpu_custom_call.1']
  #allocation5 [shape = 'u8[512]{0}', space=smem, size = 0x200, scoped, tag = 'prefetched SMEM operand 0']
  #allocation8 [shape = 's32[]', space=sflag, size = 0x4, offset = 0, fixed_abs, tag = 'sflag constant byte address 0x0 - dummy sync flag']
  #allocation9 [shape = 's32[]', space=sflag, size = 0x4, offset = 0, fixed_abs, tag = 'sflag constant byte address 0x0 - dummy sync flag']
  #allocation10 [shape = 'u32[]', space=smem, size = 0x4, offset = 0x44, fixed_abs, tag = 'smem constant byte address 0x44 - assertion arg 0']
  #allocation11 [shape = 'u32[]', space=smem, size = 0x4, offset = 0x48, fixed_abs, tag = 'smem constant byte address 0x48 - assertion arg 1']
  #allocation12 [shape = 's32[]', space=sflag, size = 0x4, offset = 0, fixed_abs, tag = 'sflag constant byte address 0x0 - dummy sync flag']
  #allocation13 [shape = 's32[]', space=sflag, size = 0x4, offset = 0, fixed_abs, tag = 'sflag constant byte address 0x0 - dummy sync flag']
  #allocation14 [shape = 's32[]', space=sflag, size = 0x4, offset = 0, fixed_abs, tag = 'sflag constant byte address 0x0 - dummy sync flag']
  #allocation15 [shape = 's32[]', space=sflag, size = 0x4, offset = 0, fixed_abs, tag = 'sflag constant byte address 0x0 - dummy sync flag']
  #allocation16 [shape = 's32[]', space=sflag, size = 0x4, offset = 0, fixed_abs, tag = 'sflag constant byte address 0x0 - dummy sync flag']
  #allocation17 [shape = 's32[]', space=sflag, size = 0x4, offset = 0, fixed_abs, tag = 'sflag constant byte address 0x0 - dummy sync flag']
  %s0 = inlined_call_operand.hbm [shape: s32[16], index: 0, kind: input, shape index: {}]
  %s1 = inlined_call_operand.hbm [shape: f32[32,128], index: 1, kind: input, shape index: {}]
  %s2 = inlined_call_operand.hbm [shape: f32[16,128], index: 2, kind: input, shape index: {}]
  %s3 = inlined_call_operand.hbm [shape: f32[16,128], index: 3, kind: output, shape index: {}]
  %s4 = sld [smem:[#allocation0]]
  $region60: #{tpu_custom_call.1} parent=0
    _
  %s6 = ssub.s32 1, %s4
  %s7 = scalar_select 0, %s6, %s4
  %9 = dma.hbm_to_smem %s0, 16, [#allocation5], [#allocation4]
  %10 = dma.done [#allocation4], 16
  %11 = sfence
  $region1: #{tpu_custom_call.1} parent=0
    #allocation6 [shape = 'u8[8192]{0}', space=vmem, size = 0x2000, scoped, tag = 'output window, operand 0, single buffered']
    #allocation7 [shape = 's32[1]{0}', space=sflag, size = 0x4, scoped, tag = 'scoped memory for tpu_custom_call.1']
    %12 = vsyncpa [#allocation7], 0
    %s13 = smul.u32 0, 16
    loop: start=0, step=1, limit=8
    $region2: #{tpu_custom_call.1} parent=1 // loop_pre_header
      _
    $region3: #{tpu_custom_call.1} parent=1 // loop_header
      %s15 = sphi 0, %s19
      %p16 = scmp.ge.s32.totalorder %s15, 8
    $region4: #{tpu_custom_call.1} parent=1 // loop_header_branch
      %18 = sbr.rel (%p16) target = $region8
    $region5: #{tpu_custom_call.1} parent=1 // loop_body
      %s20 = sand.u32 %s15, 7
      %s21 = sadd.s32 %s13, %s15
      %s22 = sld [smem:[#allocation5 + %s21]]
      %p23 = scmp.lt.s32.totalorder %s22, 0
      // Predicated region
      $region9: #{tpu_custom_call.1} parent=5 // pred_check
        %p24 = pneg %p23
      $region10: #{tpu_custom_call.1} parent=5 // pred_check_branch
        %26 = sbr.rel (%p24) target = $region12
      $region11: #{tpu_custom_call.1} parent=5 // pred_region
        %s27 = ssub.s32 4294967295, %s22
        %s28 = smul.addr %s27, 16
        %s29 = scalar_lea.hbm %s2, %s28
        %s30 = scalar_lea.vmem [#allocation2], %s15
        %s31 = scalar_lea.sflag [#allocation3], %s20
        // Predicated region
        $region13: #{tpu_custom_call.1} parent=11 // pred_check
          _
        $region14: #{tpu_custom_call.1} parent=11 // pred_check_branch
          %33 = sbr.rel target = $region16
        $region15: #{tpu_custom_call.1} parent=11 // pred_region
          %34 = sst [smem:[#allocation10]] [#allocation9]
          %35 = sst [smem:[#allocation11]] [#allocation8]
        $region16: #{tpu_custom_call.1} parent=11 // pred_fallthru
          _
        %37 = shalt.err (0)
        %s39 = sshll.u32 %s30, 4
        %s40 = int_to_ptr.vmem [resolvable:$true] %s39
        %42 = dma.hbm_to_vmem [thread:$0]  %s29, 16, %s40, %s31
      $region12: #{tpu_custom_call.1} parent=5 // pred_fallthru
        _
      %p43 = scmp.ge.s32.totalorder %s22, 0
      // Predicated region
      $region17: #{tpu_custom_call.1} parent=5 // pred_check
        %p44 = pneg %p43
      $region18: #{tpu_custom_call.1} parent=5 // pred_check_branch
        %46 = sbr.rel (%p44) target = $region20
      $region19: #{tpu_custom_call.1} parent=5 // pred_region
        %s47 = smul.addr %s22, 16
        %s48 = scalar_lea.hbm %s1, %s47
        %s49 = scalar_lea.vmem [#allocation2], %s15
        %s50 = scalar_lea.sflag [#allocation3], %s20
        // Predicated region
        $region21: #{tpu_custom_call.1} parent=19 // pred_check
          _
        $region22: #{tpu_custom_call.1} parent=19 // pred_check_branch
          %52 = sbr.rel target = $region24
        $region23: #{tpu_custom_call.1} parent=19 // pred_region
          %53 = sst [smem:[#allocation10]] [#allocation13]
          %54 = sst [smem:[#allocation11]] [#allocation12]
        $region24: #{tpu_custom_call.1} parent=19 // pred_fallthru
          _
        %56 = shalt.err (0)
        %s58 = sshll.u32 %s49, 4
        %s59 = int_to_ptr.vmem [resolvable:$true] %s58
        %61 = dma.hbm_to_vmem [thread:$0]  %s48, 16, %s59, %s50
      $region20: #{tpu_custom_call.1} parent=5 // pred_fallthru
        _
    $region6: #{tpu_custom_call.1} parent=1 // loop_footer
      %s19 = sadd.s32 1, %s15
    $region7: #{tpu_custom_call.1} parent=1 // loop_footer_branch
      %14 = sbr.rel target = $region3
    $region8: #{tpu_custom_call.1} parent=1 // loop_exit
      _
    loop: start=0, step=1, limit=16
    $region25: #{tpu_custom_call.1} parent=1 // loop_pre_header
      _
    $region26: #{tpu_custom_call.1} parent=1 // loop_header
      %s63 = sphi 0, %s67
      %p64 = scmp.ge.s32.totalorder %s63, 16
    $region27: #{tpu_custom_call.1} parent=1 // loop_header_branch
      %66 = sbr.rel (%p64) target = $region31
    $region28: #{tpu_custom_call.1} parent=1 // loop_body
      %s68 = sand.u32 %s63, 7
      %s69 = scalar_lea.sflag [#allocation3], %s68
      %s70 = smul.u32 1, 1
      %s71 = sshll.u32 %s70, 4
      %72 = dma.done %s69, %s71
      %s73 = sadd.s32 %s63, 8
      %p74 = scmp.lt.s32.totalorder %s73, 16
      // Predicated region
      $region32: #{tpu_custom_call.1} parent=28 // pred_check
        %p75 = pneg %p74
      $region33: #{tpu_custom_call.1} parent=28 // pred_check_branch
        %77 = sbr.rel (%p75) target = $region35
      $region34: #{tpu_custom_call.1} parent=28 // pred_region
        %s78 = sand.u32 %s73, 7
        %s79 = sadd.s32 %s13, %s73
        %s80 = sld [smem:[#allocation5 + %s79]]
        %p81 = scmp.lt.s32.totalorder %s80, 0
        // Predicated region
        $region36: #{tpu_custom_call.1} parent=34 // pred_check
          %p82 = pneg %p81
        $region37: #{tpu_custom_call.1} parent=34 // pred_check_branch
          %84 = sbr.rel (%p82) target = $region39
        $region38: #{tpu_custom_call.1} parent=34 // pred_region
          %s85 = ssub.s32 4294967295, %s80
          %s86 = smul.addr %s85, 16
          %s87 = scalar_lea.hbm %s2, %s86
          %s88 = scalar_lea.vmem [#allocation2], %s73
          %s89 = scalar_lea.sflag [#allocation3], %s78
          // Predicated region
          $region40: #{tpu_custom_call.1} parent=38 // pred_check
            _
          $region41: #{tpu_custom_call.1} parent=38 // pred_check_branch
            %91 = sbr.rel target = $region43
          $region42: #{tpu_custom_call.1} parent=38 // pred_region
            %92 = sst [smem:[#allocation10]] [#allocation15]
            %93 = sst [smem:[#allocation11]] [#allocation14]
          $region43: #{tpu_custom_call.1} parent=38 // pred_fallthru
            _
          %95 = shalt.err (0)
          %s97 = sshll.u32 %s88, 4
          %s98 = int_to_ptr.vmem [resolvable:$true] %s97
          %100 = dma.hbm_to_vmem [thread:$0]  %s87, 16, %s98, %s89
        $region39: #{tpu_custom_call.1} parent=34 // pred_fallthru
          _
        %p101 = scmp.ge.s32.totalorder %s80, 0
        // Predicated region
        $region44: #{tpu_custom_call.1} parent=34 // pred_check
          %p102 = pneg %p101
        $region45: #{tpu_custom_call.1} parent=34 // pred_check_branch
          %104 = sbr.rel (%p102) target = $region47
        $region46: #{tpu_custom_call.1} parent=34 // pred_region
          %s105 = smul.addr %s80, 16
          %s106 = scalar_lea.hbm %s1, %s105
          %s107 = scalar_lea.vmem [#allocation2], %s73
          %s108 = scalar_lea.sflag [#allocation3], %s78
          // Predicated region
          $region48: #{tpu_custom_call.1} parent=46 // pred_check
            _
          $region49: #{tpu_custom_call.1} parent=46 // pred_check_branch
            %110 = sbr.rel target = $region51
          $region50: #{tpu_custom_call.1} parent=46 // pred_region
            %111 = sst [smem:[#allocation10]] [#allocation17]
            %112 = sst [smem:[#allocation11]] [#allocation16]
          $region51: #{tpu_custom_call.1} parent=46 // pred_fallthru
            _
          %114 = shalt.err (0)
          %s116 = sshll.u32 %s107, 4
          %s117 = int_to_ptr.vmem [resolvable:$true] %s116
          %119 = dma.hbm_to_vmem [thread:$0]  %s106, 16, %s117, %s108
        $region47: #{tpu_custom_call.1} parent=34 // pred_fallthru
          _
      $region35: #{tpu_custom_call.1} parent=28 // pred_fallthru
        _
    $region29: #{tpu_custom_call.1} parent=1 // loop_footer
      %s67 = sadd.s32 1, %s63
    $region30: #{tpu_custom_call.1} parent=1 // loop_footer_branch
      %62 = sbr.rel target = $region26
    $region31: #{tpu_custom_call.1} parent=1 // loop_exit
      _
    %v120 = vld [vmem:[#allocation2] sm:$0xff]
    %v121 = vld [vmem:[#allocation2 + $0x8] sm:$0xff]
    %122 = vst [vmem:[#allocation6] sm:$0xff] %v120
    %123 = vst [vmem:[#allocation6 + $0x8] sm:$0xff] %v121
    // Predicated region
    $region52: #{tpu_custom_call.1} parent=1 // pred_check
      _
    $region53: #{tpu_custom_call.1} parent=1 // pred_check_branch
      %125 = sbr.rel (0) target = $region55
    $region54: #{tpu_custom_call.1} parent=1 // pred_region
      %s127 = ssub.s32 256, 256
      %128 = vsyncadd [#allocation7], %s127
      %s129 = sshll.u32 [#allocation6], 4
      %s130 = int_to_ptr.vmem [resolvable:$true] %s129
      %135 = dma.vmem_to_hbm [thread:$0]  %s130, 256, %s3, [#allocation7], 128, 128, 8
    $region55: #{tpu_custom_call.1} parent=1 // pred_fallthru
      _
    // Predicated region
    $region56: #{tpu_custom_call.1} parent=1 // pred_check
      _
    $region57: #{tpu_custom_call.1} parent=1 // pred_check_branch
      %137 = sbr.rel (0) target = $region59
    $region58: #{tpu_custom_call.1} parent=1 // pred_region
      %138 = dma.done [#allocation7], 256
    $region59: #{tpu_custom_call.1} parent=1 // pred_fallthru
      _
    %139 = vsyncpa [#allocation7], 1
  %140 = vsyncmov [#allocation3]
  %s141 = vpop.sfrf %140
  %p142 = scmp.eq.s32.totalorder %s141, 0
  %p143 = pneg %p142
  %145 = shalt.err (%p143)
  %s146 = scalar_lea.sflag [#allocation3], 1
  %147 = vsyncmov %s146
  %s148 = vpop.sfrf %147
  %p149 = scmp.eq.s32.totalorder %s148, 0
  %p150 = pneg %p149
  %152 = shalt.err (%p150)
  %s153 = scalar_lea.sflag [#allocation3], 2
  %154 = vsyncmov %s153
  %s155 = vpop.sfrf %154
  %p156 = scmp.eq.s32.totalorder %s155, 0
  %p157 = pneg %p156
  %159 = shalt.err (%p157)
  %s160 = scalar_lea.sflag [#allocation3], 3
  %161 = vsyncmov %s160
  %s162 = vpop.sfrf %161
  %p163 = scmp.eq.s32.totalorder %s162, 0
  %p164 = pneg %p163
  %166 = shalt.err (%p164)
  %s167 = scalar_lea.sflag [#allocation3], 4
  %168 = vsyncmov %s167
  %s169 = vpop.sfrf %168
  %p170 = scmp.eq.s32.totalorder %s169, 0
  %p171 = pneg %p170
  %173 = shalt.err (%p171)
  %s174 = scalar_lea.sflag [#allocation3], 5
  %175 = vsyncmov %s174
  %s176 = vpop.sfrf %175
  %p177 = scmp.eq.s32.totalorder %s176, 0
  %p178 = pneg %p177
  %180 = shalt.err (%p178)
  %s181 = scalar_lea.sflag [#allocation3], 6
  %182 = vsyncmov %s181
  %s183 = vpop.sfrf %182
  %p184 = scmp.eq.s32.totalorder %s183, 0
  %p185 = pneg %p184
  %187 = shalt.err (%p185)
  %s188 = scalar_lea.sflag [#allocation3], 7
  %189 = vsyncmov %s188
  %s190 = vpop.sfrf %189
  %p191 = scmp.eq.s32.totalorder %s190, 0
  %p192 = pneg %p191
  %194 = shalt.err (%p192)

</llo_original>
